<compile_context>
chip_gen: v6e
topology: v6e:2x2x1
jax: 0.10.0
libtpu: 0.0.40
codegen_flags: <defaults>
</compile_context>

<pallas_src>
import functools

import jax
import jax.numpy as jnp
from jax.experimental import pallas as pl
from jax.experimental.pallas import tpu as pltpu


# ---------------------------------------------------------------------------
# Single-tile path: whole L_out fits in one lane tile.  Auto-pipelined
# BlockSpecs over a (batched) row grid; padding folded into static im2col.
# ---------------------------------------------------------------------------
def _conv1d_relu_small_kernel(x_ref, w_ref, b_ref, o_ref, *, kernel_size, padding):
    nb, c_in, length = x_ref.shape          # nb rows packed per grid step
    l_out = o_ref.shape[2]
    dt = x_ref.dtype

    cols = []
    for r in range(nb):
        xv = x_ref[r]                                   # (C_in, L)
        rows = []
        for kk in range(kernel_size):
            lo = kk - padding                           # tap window start (unpadded)
            hi = lo + l_out
            s0, s1 = max(0, lo), min(length, hi)
            if s1 <= s0:                                # tap fully in the zero pad
                rows.append(jnp.zeros((c_in, l_out), dt))
                continue
            parts = []
            if s0 > lo:
                parts.append(jnp.zeros((c_in, s0 - lo), dt))
            parts.append(xv[:, s0:s1])
            if hi > s1:
                parts.append(jnp.zeros((c_in, hi - s1), dt))
            rows.append(parts[0] if len(parts) == 1
                        else jnp.concatenate(parts, axis=-1))
        cols.append(jnp.concatenate(rows, axis=0))      # (K*C_in, l_out)
    # Pack the nb rows along lanes -> one MXU matmul over nb*l_out lanes.
    patch = cols[0] if nb == 1 else jnp.concatenate(cols, axis=-1)

    acc = jnp.dot(w_ref[...], patch.astype(w_ref.dtype),
                  preferred_element_type=jnp.float32)   # (C_out, nb*l_out)
    acc = acc + b_ref[...]
    res = jnp.maximum(acc, 0.0).astype(o_ref.dtype)
    for r in range(nb):
        o_ref[r] = res[:, r * l_out:(r + 1) * l_out]


def _conv1d_relu_single(x, w_flat, b2, *, padding, k, l_out, nb):
    n, c_in, length = x.shape
    c_out = w_flat.shape[0]

    if nb is None:
        nb = max(1, min(n, 32, 512 // max(l_out, 1)))   # pack small rows per step
    nb = max(1, min(nb, n))
    while n % nb:                                       # avoid partial batch blocks
        nb -= 1

    kern = functools.partial(_conv1d_relu_small_kernel,
                             kernel_size=k, padding=padding)
    return pl.pallas_call(
        kern,
        out_shape=jax.ShapeDtypeStruct((n, c_out, l_out), x.dtype),
        grid_spec=pltpu.PrefetchScalarGridSpec(
            num_scalar_prefetch=0,
            grid=(n // nb,),
            in_specs=[
                pl.BlockSpec((nb, c_in, length), lambda i: (i, 0, 0)),
                pl.BlockSpec((c_out, k * c_in), lambda i: (0, 0)),   # resident W
                pl.BlockSpec((c_out, 1), lambda i: (0, 0)),          # resident bias
            ],
            out_specs=pl.BlockSpec((nb, c_out, l_out), lambda i: (i, 0, 0)),
        ),
        compiler_params=pltpu.CompilerParams(
            dimension_semantics=("parallel",),
            vmem_limit_bytes=32 * 1024 * 1024,
        ),
    )(x, w_flat, b2)


# ---------------------------------------------------------------------------
# Multi-tile path: L tiled on lanes, manually double-buffered halo DMA.
# Padding handled by clamping the DMA window in-bounds and statically
# repairing the (at most three) boundary tiles.
# ---------------------------------------------------------------------------
def _conv1d_relu_tiled_kernel(x_hbm, w_ref, b_ref, o_ref, xbuf, sem, *,
                              kernel_size, padding, tl, tlw, length,
                              right_specials):
    """One (n, j) grid step: out[n, :, j*tl:(j+1)*tl] = relu(W_flat @ im2col + b).

    x_hbm : (N, C_in, L)      raw HBM ref (memory_space=pl.ANY, UNPADDED)
    w_ref : (C_out, K*C_in)   VMEM-resident flattened weights
    b_ref : (C_out, 1)        VMEM-resident bias
    o_ref : (1, C_out, TL)    output tile (L on lanes -> dense stores)
    xbuf  : (2, C_in, TLW)    double-buffered halo window, TLW = TL + K - 1
    sem   : DMA semaphores, shape (2,)
    """
    n = pl.program_id(0)
    j = pl.program_id(1)
    num_l_tiles = pl.num_programs(1)
    c_in = xbuf.shape[1]

    def window_copy(jj, slot):
        # Desired window start is jj*tl - padding; clamp it in-bounds so every
        # DMA is a full (C_in, TLW) copy; boundary tiles are repaired below.
        start = jnp.clip(jj * tl - padding, 0, length - tlw)
        return pltpu.make_async_copy(
            x_hbm.at[n, :, pl.ds(start, tlw)],
            xbuf.at[slot],
            sem.at[slot],
        )

    slot = j % 2

    # Prime the pipeline at the first L-tile of this batch row (works per-core
    # under megacore sharding of the "parallel" batch axis).
    @pl.when(j == 0)
    def _():
        window_copy(j, slot).start()

    # Prefetch the next tile's halo window so its DMA overlaps this tile's compute.
    @pl.when(j + 1 < num_l_tiles)
    def _():
        window_copy(j + 1, 1 - slot).start()

    window_copy(j, slot).wait()

    # ---- boundary repairs (static shift amounts; at most one fires per tile) ----
    if padding > 0:
        @pl.when(j == 0)                      # window stuck out past the left edge
        def _():
            cur = xbuf[slot]
            xbuf[slot] = jnp.concatenate(
                [jnp.zeros((c_in, padding), cur.dtype), cur[:, :tlw - padding]],
                axis=-1)

    for jj, ov in right_specials:             # window stuck out past the right edge
        @pl.when(j == jj)
        def _(ov=ov):
            cur = xbuf[slot]
            xbuf[slot] = jnp.concatenate(
                [cur[:, ov:], jnp.zeros((c_in, ov), cur.dtype)], axis=-1)

    # im2col: K lane-shifted copies stacked along the contraction (sublane) axis.
    xw = xbuf[slot].astype(w_ref.dtype)                          # (C_in, TLW)
    patch = jnp.concatenate(
        [xw[:, kk:kk + tl] for kk in range(kernel_size)], axis=0)  # (K*C_in, TL)

    # Single MXU matmul with the full K*C_in contraction, f32 accumulation.
    acc = jnp.dot(w_ref[...], patch, preferred_element_type=jnp.float32)
    acc = acc + b_ref[...]                                       # f32 epilogue
    o_ref[0] = jnp.maximum(acc, 0.0).astype(o_ref.dtype)


def _conv1d_relu_tiled(x, w_flat, b2, *, padding, k, l_out, tl):
    n, c_in, length = x.shape
    c_out = w_flat.shape[0]
    num_l_tiles = pl.cdiv(l_out, tl)
    tlw = tl + k - 1
    assert num_l_tiles >= 2 and length >= tlw and tl >= padding and padding < k

    # Tiles whose halo window overruns the right edge of x (at most the last two);
    # the overrun amounts are compile-time constants.
    right_specials = tuple(
        (jj, jj * tl + tlw - padding - length)
        for jj in range(num_l_tiles)
        if jj * tl + tlw - padding - length > 0)

    kern = functools.partial(
        _conv1d_relu_tiled_kernel, kernel_size=k, padding=padding, tl=tl, tlw=tlw,
        length=length, right_specials=right_specials)

    return pl.pallas_call(
        kern,
        out_shape=jax.ShapeDtypeStruct((n, c_out, l_out), x.dtype),
        grid_spec=pltpu.PrefetchScalarGridSpec(
            num_scalar_prefetch=0,
            grid=(n, num_l_tiles),
            in_specs=[
                pl.BlockSpec(memory_space=pl.ANY),                     # raw HBM input
                pl.BlockSpec((c_out, k * c_in), lambda i, j: (0, 0)),  # resident W
                pl.BlockSpec((c_out, 1), lambda i, j: (0, 0)),         # resident bias
            ],
            out_specs=pl.BlockSpec((1, c_out, tl), lambda i, j: (i, 0, j)),
            scratch_shapes=[
                pltpu.VMEM((2, c_in, tlw), x.dtype),
                pltpu.SemaphoreType.DMA((2,)),
            ],
        ),
        compiler_params=pltpu.CompilerParams(
            dimension_semantics=("parallel", "arbitrary"),
            vmem_limit_bytes=32 * 1024 * 1024,
        ),
    )(x, w_flat, b2)


def conv1d_relu(x, w, b, *, padding=0, tl=None, nb=None, compute_dtype=None):
    """PyTorch-equivalent Conv1d(stride=1, padding=padding) + ReLU.

    x: (N, C_in, L), w: (C_out, C_in, K), b: (C_out,)  ->  (N, C_out, L_out), NCL.
    """
    # TODO(synk): stride > 1 not implemented (module's documented configs are stride=1).
    n, c_in, length = x.shape
    c_out, c_in_w, k = w.shape
    assert c_in_w == c_in
    l_out = length + 2 * padding - k + 1
    assert l_out >= 1

    # Flatten weights so the K taps live on the contraction axis:
    #   w_flat[co, kk*C_in + c] == w[co, c, kk]
    w_flat = jnp.transpose(w, (0, 2, 1)).reshape(c_out, k * c_in)
    if compute_dtype is not None:          # e.g. jnp.bfloat16 feeds on v6e/v7x
        w_flat = w_flat.astype(compute_dtype)
    b2 = b.reshape(c_out, 1).astype(jnp.float32)

    # L-tile: full L_out when it fits one lane tile, else a lane-dense multiple of 128.
    tl_cap = 1024
    tile = (l_out if l_out <= tl_cap else tl_cap) if tl is None else min(tl, l_out)

    if tile >= l_out or length < tile + k - 1 or padding >= k:
        return _conv1d_relu_single(x, w_flat, b2, padding=padding, k=k,
                                   l_out=l_out, nb=nb)
    return _conv1d_relu_tiled(x, w_flat, b2, padding=padding, k=k,
                              l_out=l_out, tl=tile)


# ---------------------------------------------------------------------------
# Self-test
# ---------------------------------------------------------------------------
def _reference(x, w, b, *, padding):
    out = jax.lax.conv_general_dilated(
        x, w, window_strides=(1,), padding=[(padding, padding)],
        dimension_numbers=("NCH", "OIH", "NCH"))
    return jnp.maximum(out + b[None, :, None], 0.0)


def _run_case(key, n, c_in, c_out, length, k, pad, tl=None):
    kx, kw, kb = jax.random.split(key, 3)
    x = jax.random.normal(kx, (n, c_in, length), dtype=jnp.float32)
    w = jax.random.normal(kw, (c_out, c_in, k), dtype=jnp.float32) * 0.1
    b = jax.random.normal(kb, (c_out,), dtype=jnp.float32) * 0.1

    out = jax.block_until_ready(conv1d_relu(x, w, b, padding=pad, tl=tl))
    ref = _reference(x, w, b, padding=pad)
    assert out.shape == ref.shape, (out.shape, ref.shape)
    err = jnp.max(jnp.abs(out - ref))
    assert jnp.allclose(out, ref, atol=1e-5, rtol=1e-4), f"mismatch, max abs err {err}"


if __name__ == "__main__":
    key = jax.random.PRNGKey(0)
    keys = jax.random.split(key, 6)

    # Single-tile path (auto-pipelined, row-batched), configs from the module docstring.
    _run_case(keys[0], n=2, c_in=4, c_out=8, length=16, k=3, pad=1)
    _run_case(keys[1], n=4, c_in=4, c_out=8, length=16, k=7, pad=3)

    # Multi-tile path (manual double-buffered halo DMA, in-kernel boundary repair).
    _run_case(keys[2], n=2, c_in=4, c_out=8, length=140, k=3, pad=0, tl=128)   # no pad, right clip
    _run_case(keys[3], n=2, c_in=4, c_out=8, length=256, k=5, pad=2, tl=128)   # left + right clip
    _run_case(keys[4], n=2, c_in=4, c_out=8, length=300, k=5, pad=2, tl=128)   # partial last out tile
    _run_case(keys[5], n=2, c_in=4, c_out=8, length=257, k=5, pad=2, tl=128)   # two right-clipped tiles

    print("KERNEL_OK")
</pallas_src>

<mosaic_0001>
module attributes {stable_mosaic.version = 11 : i64} {
  func.func @_conv1d_relu_small_kernel(%arg0: i32, %arg1: memref<2x4x16xf32, #tpu.memory_space<vmem>>, %arg2: memref<8x12xf32, #tpu.memory_space<vmem>>, %arg3: memref<8x1xf32, #tpu.memory_space<vmem>>, %arg4: memref<2x8x16xf32, #tpu.memory_space<vmem>>) attributes {dimension_semantics = [#tpu.dimension_semantics<parallel>], iteration_bounds = array<i64: 1>, scalar_prefetch = 0 : i64, scratch_operands = 0 : i64, tpu.core_type = #tpu.core_type<tc>, window_params = [{transform_indices = @transform_0, window_bounds = array<i64: 2, 4, 16>}, {pipeline_mode = #tpu.pipeline_mode<synchronous>, transform_indices = @transform_1, window_bounds = array<i64: 8, 12>}, {pipeline_mode = #tpu.pipeline_mode<synchronous>, transform_indices = @transform_2, window_bounds = array<i64: 8, 1>}, {transform_indices = @transform_3, window_bounds = array<i64: 2, 8, 16>}]} {
    %c0 = arith.constant 0 : index
    %c0_0 = arith.constant 0 : index
    %c0_1 = arith.constant 0 : index
    %0 = vector.load %arg1[%c0, %c0_0, %c0_1] : memref<2x4x16xf32, #tpu.memory_space<vmem>>, vector<1x4x16xf32>
    %1 = vector.shape_cast %0 : vector<1x4x16xf32> to vector<4x16xf32>
    %cst = arith.constant 0.000000e+00 : f32
    %2 = vector.broadcast %cst : f32 to vector<4x1xf32>
    %3 = vector.extract_strided_slice %1 {offsets = [0, 0], sizes = [4, 15], strides = [1, 1]} : vector<4x16xf32> to vector<4x15xf32>
    %4 = tpu.concatenate %2, %3 in 1 : vector<4x1xf32>, vector<4x15xf32> -> vector<4x16xf32>
    %5 = vector.extract_strided_slice %1 {offsets = [0, 1], sizes = [4, 15], strides = [1, 1]} : vector<4x16xf32> to vector<4x15xf32>
    %cst_2 = arith.constant 0.000000e+00 : f32
    %6 = vector.broadcast %cst_2 : f32 to vector<4x1xf32>
    %7 = tpu.concatenate %5, %6 in 1 : vector<4x15xf32>, vector<4x1xf32> -> vector<4x16xf32>
    %8 = tpu.concatenate %4, %1, %7 in 0 : vector<4x16xf32>, vector<4x16xf32>, vector<4x16xf32> -> vector<12x16xf32>
    %c1 = arith.constant 1 : index
    %c0_3 = arith.constant 0 : index
    %c0_4 = arith.constant 0 : index
    %9 = vector.load %arg1[%c1, %c0_3, %c0_4] : memref<2x4x16xf32, #tpu.memory_space<vmem>>, vector<1x4x16xf32>
    %10 = vector.shape_cast %9 : vector<1x4x16xf32> to vector<4x16xf32>
    %cst_5 = arith.constant 0.000000e+00 : f32
    %11 = vector.broadcast %cst_5 : f32 to vector<4x1xf32>
    %12 = vector.extract_strided_slice %10 {offsets = [0, 0], sizes = [4, 15], strides = [1, 1]} : vector<4x16xf32> to vector<4x15xf32>
    %13 = tpu.concatenate %11, %12 in 1 : vector<4x1xf32>, vector<4x15xf32> -> vector<4x16xf32>
    %14 = vector.extract_strided_slice %10 {offsets = [0, 1], sizes = [4, 15], strides = [1, 1]} : vector<4x16xf32> to vector<4x15xf32>
    %cst_6 = arith.constant 0.000000e+00 : f32
    %15 = vector.broadcast %cst_6 : f32 to vector<4x1xf32>
    %16 = tpu.concatenate %14, %15 in 1 : vector<4x15xf32>, vector<4x1xf32> -> vector<4x16xf32>
    %17 = tpu.concatenate %13, %10, %16 in 0 : vector<4x16xf32>, vector<4x16xf32>, vector<4x16xf32> -> vector<12x16xf32>
    %18 = tpu.concatenate %8, %17 in 1 : vector<12x16xf32>, vector<12x16xf32> -> vector<12x32xf32>
    %c0_7 = arith.constant 0 : index
    %c0_8 = arith.constant 0 : index
    %19 = vector.load %arg2[%c0_7, %c0_8] : memref<8x12xf32, #tpu.memory_space<vmem>>, vector<8x12xf32>
    %cst_9 = arith.constant dense<0.000000e+00> : vector<8x32xf32>
    %20 = tpu.matmul %19, %18, %cst_9 {dimension_numbers = #tpu.dot_dimension_numbers<[1], [0], [0], [1], [0, 0, 1, 1], [], []>} : vector<8x12xf32>, vector<12x32xf32>, vector<8x32xf32> -> vector<8x32xf32>
    %c0_10 = arith.constant 0 : index
    %c0_11 = arith.constant 0 : index
    %21 = vector.load %arg3[%c0_10, %c0_11] : memref<8x1xf32, #tpu.memory_space<vmem>>, vector<8x1xf32>
    %22 = vector.broadcast %21 : vector<8x1xf32> to vector<8x32xf32>
    %23 = arith.addf %20, %22 : vector<8x32xf32>
    %cst_12 = arith.constant 0.000000e+00 : f32
    %24 = vector.broadcast %cst_12 : f32 to vector<8x32xf32>
    %25 = arith.maximumf %23, %24 : vector<8x32xf32>
    %26 = vector.extract_strided_slice %25 {offsets = [0, 0], sizes = [8, 16], strides = [1, 1]} : vector<8x32xf32> to vector<8x16xf32>
    %c0_13 = arith.constant 0 : index
    %c0_14 = arith.constant 0 : index
    %c0_15 = arith.constant 0 : index
    %27 = vector.load %arg4[%c0_13, %c0_14, %c0_15] : memref<2x8x16xf32, #tpu.memory_space<vmem>>, vector<1x8x16xf32>
    %28 = vector.shape_cast %27 : vector<1x8x16xf32> to vector<8x16xf32>
    %29 = vector.shape_cast %26 : vector<8x16xf32> to vector<1x8x16xf32>
    tpu.vector_store %arg4[%c0_13, %c0_14, %c0_15], %29 {strides = array<i32>} : memref<2x8x16xf32, #tpu.memory_space<vmem>>, vector<1x8x16xf32>,
    %30 = vector.extract_strided_slice %25 {offsets = [0, 16], sizes = [8, 16], strides = [1, 1]} : vector<8x32xf32> to vector<8x16xf32>
    %c1_16 = arith.constant 1 : index
    %c0_17 = arith.constant 0 : index
    %c0_18 = arith.constant 0 : index
    %31 = vector.load %arg4[%c1_16, %c0_17, %c0_18] : memref<2x8x16xf32, #tpu.memory_space<vmem>>, vector<1x8x16xf32>
    %32 = vector.shape_cast %31 : vector<1x8x16xf32> to vector<8x16xf32>
    %33 = vector.shape_cast %30 : vector<8x16xf32> to vector<1x8x16xf32>
    tpu.vector_store %arg4[%c1_16, %c0_17, %c0_18], %33 {strides = array<i32>} : memref<2x8x16xf32, #tpu.memory_space<vmem>>, vector<1x8x16xf32>,
    return
  }
  func.func @transform_0(%arg0: i32) -> (i32, i32, i32) {
    %c0_i32 = arith.constant 0 : i32
    %c0_i32_0 = arith.constant 0 : i32
    %c0_i32_1 = arith.constant 0 : i32
    return %arg0, %c0_i32, %c0_i32_0 : i32, i32, i32
  }
  func.func @transform_1(%arg0: i32) -> (i32, i32) {
    %c0_i32 = arith.constant 0 : i32
    %c0_i32_0 = arith.constant 0 : i32
    %c0_i32_1 = arith.constant 0 : i32
    return %c0_i32, %c0_i32_0 : i32, i32
  }
  func.func @transform_2(%arg0: i32) -> (i32, i32) {
    %c0_i32 = arith.constant 0 : i32
    %c0_i32_0 = arith.constant 0 : i32
    %c0_i32_1 = arith.constant 0 : i32
    return %c0_i32, %c0_i32_0 : i32, i32
  }
  func.func @transform_3(%arg0: i32) -> (i32, i32, i32) {
    %c0_i32 = arith.constant 0 : i32
    %c0_i32_0 = arith.constant 0 : i32
    %c0_i32_1 = arith.constant 0 : i32
    return %arg0, %c0_i32, %c0_i32_0 : i32, i32, i32
  }
}

</mosaic_0001>

<llo_original>
// kernel: tpu_custom_call.1
$region0: #{tpu_custom_call.1}
  #allocation0 [shape = 'u32[]', space=smem, size = 0x4, offset = 0x4, fixed_abs, tag = 'smem constant byte address 0x4 - core index']
  #allocation1 [shape = 'u32[144,128]{1,0:T(1,128)}', space=vmem, size = 0x12000, scoped, tag = 'internal scratch']
  %s0 = inlined_call_operand.vmem [shape: f32[2,4,16], index: 0, kind: input, shape index: {}]
  %s1 = inlined_call_operand.hbm [shape: f32[8,12], index: 1, kind: input, shape index: {}]
  %s2 = inlined_call_operand.vmem [shape: f32[8,1], index: 2, kind: input, shape index: {}]
  %s3 = inlined_call_operand.hbm [shape: f32[2,8,16], index: 3, kind: output, shape index: {}]
  %s4 = sld [smem:[#allocation0]]
  $region26: #{tpu_custom_call.1} parent=0
    _
  %s6 = ssub.s32 1, %s4
  %s7 = scalar_select 0, %s6, %s4
  $region1: #{tpu_custom_call.1} parent=0
    #allocation2 [shape = 'u8[4096]{0}', space=vmem, size = 0x1000, scoped, tag = 'input window, operand 1, single buffered']
    #allocation3 [shape = 's32[1]{0}', space=sflag, size = 0x4, scoped, tag = 'scoped memory for tpu_custom_call.1']
    #allocation4 [shape = 's32[1]{0}', space=sflag, size = 0x4, scoped, tag = 'scoped memory for tpu_custom_call.1']
    #allocation5 [shape = 'u8[8192]{0}', space=vmem, size = 0x2000, scoped, tag = 'output window, operand 0, single buffered']
    %8 = vsyncpa [#allocation3], 0
    %9 = vsyncpa [#allocation4], 0
    // Predicated region
    $region2: #{tpu_custom_call.1} parent=1 // pred_check
      _
    $region3: #{tpu_custom_call.1} parent=1 // pred_check_branch
      %11 = sbr.rel (0) target = $region5
    $region4: #{tpu_custom_call.1} parent=1 // pred_region
      _
    $region5: #{tpu_custom_call.1} parent=1 // pred_fallthru
      _
    // Predicated region
    $region6: #{tpu_custom_call.1} parent=1 // pred_check
      _
    $region7: #{tpu_custom_call.1} parent=1 // pred_check_branch
      %13 = sbr.rel (0) target = $region9
    $region8: #{tpu_custom_call.1} parent=1 // pred_region
      %s15 = ssub.s32 128, 128
      %16 = vsyncadd [#allocation3], %s15
      %s18 = sshll.u32 [#allocation2], 4
      %s19 = int_to_ptr.vmem [resolvable:$true] %s18
      %21 = dma.hbm_to_vmem [thread:$0]  %s1, 128, %s19, [#allocation3]
    $region9: #{tpu_custom_call.1} parent=1 // pred_fallthru
      _
    // Predicated region
    $region10: #{tpu_custom_call.1} parent=1 // pred_check
      _
    $region11: #{tpu_custom_call.1} parent=1 // pred_check_branch
      %23 = sbr.rel (0) target = $region13
    $region12: #{tpu_custom_call.1} parent=1 // pred_region
      _
    $region13: #{tpu_custom_call.1} parent=1 // pred_fallthru
      _
    // Predicated region
    $region14: #{tpu_custom_call.1} parent=1 // pred_check
      _
    $region15: #{tpu_custom_call.1} parent=1 // pred_check_branch
      %25 = sbr.rel (0) target = $region17
    $region16: #{tpu_custom_call.1} parent=1 // pred_region
      %26 = dma.done [#allocation3], 128
    $region17: #{tpu_custom_call.1} parent=1 // pred_fallthru
      _
    %v27 = vld [vmem:[%s0] sm:$0xf]
    %29 = vrot.lane.b32.xlu0 %v27, 1
    %v30 = vpop.permute.xlu0 %29
    %vm32 = vcmask 7168
    %v33 = vsel %vm32, 0.0, %v30
    %34 = vrot.lane.b32.xlu0 %v27, 127
    %v35 = vpop.permute.xlu0 %34
    %vm37 = vcmask 121856
    %v38 = vsel %vm37, %v35, 0.0
    %v39 = vrot.slane %v27, 4
    %vm41 = vcmask 1043456
    %v42 = vsel %vm41, %v33, %v39
    %s43 = scalar_lea.vmem %s0, 4
    %v44 = vld [vmem:[%s43] sm:$0xf]
    %46 = vrot.lane.b32.xlu0 %v44, 1
    %v47 = vpop.permute.xlu0 %46
    %v49 = vsel %vm32, 0.0, %v47
    %50 = vrot.lane.b32.xlu0 %v44, 127
    %v51 = vpop.permute.xlu0 %50
    %v53 = vsel %vm37, %v51, 0.0
    %v54 = vrot.slane %v44, 4
    %v56 = vsel %vm41, %v49, %v54
    %59 = vrot.lane.b32.xlu0 %v56, 16
    %v60 = vpop.permute.xlu0 %59
    %61 = vrot.lane.b32.xlu0 %v53, 16
    %v62 = vpop.permute.xlu0 %61
    %vm65 = vcmask 130048
    %v66 = vsel %vm65, %v42, %v60
    %v67 = vsel %vm65, %v38, %v62
    %v68 = vld [vmem:[#allocation2] sm:$0xff]
    %v69 = vld [vmem:[%s2] sm:$0xff]
    %71 = vset.pattern.permute.xlu0 0
    %72 = vperm.xlu0 %71, %v69
    %v73 = vpop.permute.xlu0 %72
    %vm75 = vcmask 97280
    %v77 = vsel %vm75, %v68, 0
    %v80 = vsel %vm41, %v67, 0
    %82 = vmatprep.subr.mxu0 0.0
    %83 = vmatpush1.msra.mxu0 0.0
    %84 = vmatprep.subr.mxu0 0.0
    %85 = vmatpush1.msra.mxu0 0.0
    %86 = vmatprep.subr.mxu0 0.0
    %87 = vmatpush1.msra.mxu0 0.0
    %88 = vmatprep.subr.mxu0 0.0
    %89 = vmatpush1.msra.mxu0 0.0
    %90 = vmatprep.subr.mxu0 0.0
    %91 = vmatpush1.msra.mxu0 0.0
    %92 = vmatprep.subr.mxu0 0.0
    %93 = vmatpush1.msra.mxu0 0.0
    %94 = vmatprep.subr.mxu0 0.0
    %95 = vmatpush1.msra.mxu0 0.0
    %96 = vmatprep.subr.mxu0 0.0
    %97 = vmatpush1.msra.mxu0 0.0
    %98 = vmatprep.subr.mxu0 0.0
    %99 = vmatpush1.msra.mxu0 0.0
    %100 = vmatprep.subr.mxu0 0.0
    %101 = vmatpush1.msra.mxu0 0.0
    %102 = vmatprep.subr.mxu0 0.0
    %103 = vmatpush1.msra.mxu0 0.0
    %104 = vmatprep.subr.mxu0 0.0
    %105 = vmatpush1.msra.mxu0 0.0
    %106 = vmatprep.subr.mxu0 0.0
    %107 = vmatpush1.msra.mxu0 0.0
    %108 = vmatprep.subr.mxu0 0.0
    %109 = vmatpush1.msra.mxu0 0.0
    %110 = vmatprep.subr.mxu0 0.0
    %111 = vmatpush1.msra.mxu0 %v80
    %112 = vmatprep.subr.mxu0 0.0
    %113 = vmatpush1.msra.mxu0 %v66
    %114 = vmatprep.subr.mxu0 0.0
    %115 = vmatpush2.msra.mxu0 0.0
    %116 = vmatprep.subr.mxu0 0.0
    %117 = vmatpush2.msra.mxu0 0.0
    %118 = vmatprep.subr.mxu0 0.0
    %119 = vmatpush2.msra.mxu0 0.0
    %120 = vmatprep.subr.mxu0 0.0
    %121 = vmatpush2.msra.mxu0 0.0
    %122 = vmatprep.subr.mxu0 0.0
    %123 = vmatpush2.msra.mxu0 0.0
    %124 = vmatprep.subr.mxu0 0.0
    %125 = vmatpush2.msra.mxu0 0.0
    %126 = vmatprep.subr.mxu0 0.0
    %127 = vmatpush2.msra.mxu0 0.0
    %128 = vmatprep.subr.mxu0 0.0
    %129 = vmatpush2.msra.mxu0 0.0
    %130 = vmatprep.subr.mxu0 0.0
    %131 = vmatpush2.msra.mxu0 0.0
    %132 = vmatprep.subr.mxu0 0.0
    %133 = vmatpush2.msra.mxu0 0.0
    %134 = vmatprep.subr.mxu0 0.0
    %135 = vmatpush2.msra.mxu0 0.0
    %136 = vmatprep.subr.mxu0 0.0
    %137 = vmatpush2.msra.mxu0 0.0
    %138 = vmatprep.subr.mxu0 0.0
    %139 = vmatpush2.msra.mxu0 0.0
    %140 = vmatprep.subr.mxu0 0.0
    %141 = vmatpush2.msra.mxu0 0.0
    %142 = vmatprep.subr.mxu0 0.0
    %143 = vmatpush2.msra.mxu0 0.0
    %144 = vmatprep.subr.mxu0 0.0
    %145 = vmatpush2.msra.mxu0 0.0
    %146 = vmatprep.mubr.f32.mxu0 0.0
    %147 = vmatmul.mubr.f32.gmra.mxu0 %v77
    %v148 = vpop.f32.mrf.mxu0
    %v149 = vadd.f32 %v73, %v148
    %v150 = vpop.f32.mrf.mxu0
    %151 = vdwg.mxu0
    %v152 = vmax.f32 %v149, 0.0
    %153 = vst.msk [vmem:[#allocation5] sm:$0xff] %vm65, %v152
    %155 = vrot.lane.b32.xlu0 %v152, 112
    %v156 = vpop.permute.xlu0 %155
    %s158 = scalar_lea.vmem [#allocation5], 8
    %159 = vst.msk [vmem:[%s158] sm:$0xff] %vm65, %v156
    // Predicated region
    $region18: #{tpu_custom_call.1} parent=1 // pred_check
      _
    $region19: #{tpu_custom_call.1} parent=1 // pred_check_branch
      %161 = sbr.rel (0) target = $region21
    $region20: #{tpu_custom_call.1} parent=1 // pred_region
      %s163 = ssub.s32 256, 256
      %164 = vsyncadd [#allocation4], %s163
      %s165 = sshll.u32 [#allocation5], 4
      %s166 = int_to_ptr.vmem [resolvable:$true] %s165
      %171 = dma.vmem_to_hbm [thread:$0]  %s166, 256, %s3, [#allocation4], 128, 128, 8
    $region21: #{tpu_custom_call.1} parent=1 // pred_fallthru
      _
    // Predicated region
    $region22: #{tpu_custom_call.1} parent=1 // pred_check
      _
    $region23: #{tpu_custom_call.1} parent=1 // pred_check_branch
      %173 = sbr.rel (0) target = $region25
    $region24: #{tpu_custom_call.1} parent=1 // pred_region
      %174 = dma.done [#allocation4], 256
    $region25: #{tpu_custom_call.1} parent=1 // pred_fallthru
      _
    %175 = vsyncpa [#allocation3], 1
    %176 = vsyncpa [#allocation4], 1

</llo_original>
